<compile_context>
chip_gen: v5e
topology: v5e:2x2
jax: 0.10.0
libtpu: 0.0.40
codegen_flags: <defaults>
</compile_context>

<pallas_src>
import functools

import jax
import jax.numpy as jnp
from jax.experimental import pallas as pl
from jax.experimental.pallas import tpu as pltpu

LANE = 128      # lane width: feature dims padded to this inside the kernel
SUBLANE = 8     # f32 sublane granularity for the batch tile
NUM_LAYERS = 6


def _make_kernel(n_in, n_out):
    """Builds the fused-MLP kernel for static (n_in, n_out)."""

    def kernel(x_ref, w_ref, b_ref, o_ref, xpad_ref):
        # x_ref:   [tb, n_in]      f32   (streams per batch tile)
        # w_ref:   [6, 128, 128]   bf16  (resident in VMEM, zero-padded)
        # b_ref:   [6, 1, 128]     f32   (resident in VMEM, zero-padded)
        # o_ref:   [1, n_out, tb]  f32   (lane-dense transposed output block)
        # xpad_ref:[tb, 128]       f32   scratch

        # Zero-place the narrow input tile into a lane-padded buffer.
        # Zero every step (scratch persists, but the parallel axis may be
        # sharded across cores, so don't rely on a step-0-only init).
        xpad_ref[...] = jnp.zeros_like(xpad_ref)
        xpad_ref[:, :n_in] = x_ref[...]
        h = xpad_ref[...]                                   # f32 [tb, 128]

        # 5 hidden layers with sigmoid.  bf16 MXU dots, f32 accumulate/VPU/EUP.
        for i in range(NUM_LAYERS - 1):
            z = jnp.dot(h.astype(jnp.bfloat16), w_ref[i],
                        preferred_element_type=jnp.float32) + b_ref[i]
            h = jax.nn.sigmoid(z)                           # exp on the EUP

        # Final linear layer (no activation).
        z = jnp.dot(h.astype(jnp.bfloat16), w_ref[NUM_LAYERS - 1],
                    preferred_element_type=jnp.float32) + b_ref[NUM_LAYERS - 1]

        # Transpose on the XLU so the tiny-n_out output is written lane-dense
        # along the batch-tile axis instead of 128x write-amplified rows.
        zt = jnp.transpose(z)                               # [128, tb]
        o_ref[0] = zt[:n_out, :].astype(o_ref.dtype)        # [n_out, tb]

    return kernel


def pack_params(params, pad=LANE):
    """Pack [(W [in,out], b [out]), ...] into bf16 weight slab + f32 bias slab.

    Rows of W beyond the real fan-in and columns beyond the real fan-out are
    zero, so lane-padded activations (including the sigmoid(0)=0.5 padding
    lanes) contribute nothing to the real outputs.
    """
    n = len(params)
    w_slab = jnp.zeros((n, pad, pad), jnp.bfloat16)
    b_slab = jnp.zeros((n, 1, pad), jnp.float32)
    for i, (w, b) in enumerate(params):
        fi, fo = w.shape
        w_slab = w_slab.at[i, :fi, :fo].set(w.astype(jnp.bfloat16))
        b_slab = b_slab.at[i, 0, :fo].set(b.reshape(-1).astype(jnp.float32))
    return w_slab, b_slab


def _round_up(v, m):
    return ((v + m - 1) // m) * m


@functools.partial(jax.jit, static_argnames=("n_output", "block_b"))
def mlp_forward(x, w_slab, b_slab, *, n_output, block_b=1024):
    """x: [B, n_inputs] f32.  Returns [B, n_output] f32."""
    B, n_in = x.shape
    assert 1 <= n_in <= LANE, "n_inputs must be <= 128 for this kernel"
    assert 1 <= n_output <= LANE, "n_output must be <= 128 for this kernel"

    # Batch tile: multiple of the f32 sublane (8), capped at block_b, and
    # chosen so there are >=2 grid steps when B allows it (v7x has 2 TCs
    # sharded over the "parallel" axis; v5e/v6e are unaffected).
    tb = _round_up(B, SUBLANE)
    if B > SUBLANE:
        tb = min(tb, _round_up((B + 1) // 2, SUBLANE))
    tb = min(tb, _round_up(block_b, SUBLANE))
    b_pad = _round_up(B, tb)
    grid_b = b_pad // tb

    # Batch-only zero padding (no lane padding of x in HBM).
    x_p = x.astype(jnp.float32)
    if b_pad != B:
        x_p = jnp.zeros((b_pad, n_in), jnp.float32).at[:B].set(x_p)

    kernel = _make_kernel(n_in, n_output)
    out_t = pl.pallas_call(
        kernel,
        out_shape=jax.ShapeDtypeStruct((grid_b, n_output, tb), jnp.float32),
        grid=(grid_b,),
        in_specs=[
            pl.BlockSpec((tb, n_in), lambda i: (i, 0)),        # x streams per tile
            pl.BlockSpec(w_slab.shape, lambda i: (0, 0, 0)),   # weights resident
            pl.BlockSpec(b_slab.shape, lambda i: (0, 0, 0)),   # biases resident
        ],
        out_specs=pl.BlockSpec((1, n_output, tb), lambda i: (i, 0, 0)),
        scratch_shapes=[pltpu.VMEM((tb, LANE), jnp.float32)],
        compiler_params=pltpu.CompilerParams(
            dimension_semantics=("parallel",)),
    )(x_p, w_slab, b_slab)

    # [grid, n_out, tb] -> [b_pad, n_out] -> [B, n_out]
    out = jnp.transpose(out_t, (0, 2, 1)).reshape(b_pad, n_output)
    return out[:B]


# ----------------------------- init / reference ------------------------------

def xavier_uniform(key, fan_in, fan_out, dtype=jnp.float32):
    # Matches torch.nn.init.xavier_uniform_ (gain=1).
    a = jnp.sqrt(6.0 / (fan_in + fan_out))
    return jax.random.uniform(key, (fan_in, fan_out), dtype, minval=-a, maxval=a)


def default_bias(key, fan_in, fan_out, dtype=jnp.float32):
    # Matches torch Linear default bias init: U(-1/sqrt(fan_in), 1/sqrt(fan_in)).
    bound = 1.0 / jnp.sqrt(jnp.float32(fan_in))
    return jax.random.uniform(key, (fan_out,), dtype, minval=-bound, maxval=bound)


def make_params(key, n_inputs, n_output):
    dims = [(n_inputs, 10), (10, 10), (10, 10), (10, 10), (10, 10), (10, n_output)]
    params = []
    for (fi, fo) in dims:
        key, kw, kb = jax.random.split(key, 3)
        params.append((xavier_uniform(kw, fi, fo), default_bias(kb, fi, fo)))
    return params


def mlp_reference(x, params):
    h = x
    for i, (w, b) in enumerate(params):
        h = h @ w + b
        if i < len(params) - 1:
            h = jax.nn.sigmoid(h)
    return h


if __name__ == "__main__":
    key = jax.random.PRNGKey(0)
    k_x, k_p = jax.random.split(key)

    batch, n_inputs, n_output = 32, 4, 1
    x = jax.random.normal(k_x, (batch, n_inputs), jnp.float32)
    params = make_params(k_p, n_inputs, n_output)
    w_slab, b_slab = pack_params(params)

    out = mlp_forward(x, w_slab, b_slab, n_output=n_output)
    out = jax.block_until_ready(out)

    ref = mlp_reference(x, params)
    assert out.shape == (batch, n_output)
    # bf16 matmul inputs (f32 accumulation) => ~1e-2-level differences vs the
    # pure-f32 reference; tolerance relaxed accordingly.
    assert jnp.allclose(out, ref, atol=5e-2, rtol=5e-2), "mismatch vs reference"

    print("KERNEL_OK")
</pallas_src>

<mosaic_0001>
module attributes {stable_mosaic.version = 11 : i64} {
  func.func @kernel(%arg0: i32, %arg1: memref<16x4xf32, #tpu.memory_space<vmem>>, %arg2: memref<6x128x128xbf16, #tpu.memory_space<vmem>>, %arg3: memref<6x1x128xf32, #tpu.memory_space<vmem>>, %arg4: memref<1x1x16xf32, #tpu.memory_space<vmem>>, %arg5: memref<16x128xf32, #tpu.memory_space<vmem>>) attributes {dimension_semantics = [#tpu.dimension_semantics<parallel>], iteration_bounds = array<i64: 2>, scalar_prefetch = 0 : i64, scratch_operands = 1 : i64, tpu.core_type = #tpu.core_type<tc>, window_params = [{transform_indices = @transform_0, window_bounds = array<i64: 16, 4>}, {pipeline_mode = #tpu.pipeline_mode<synchronous>, transform_indices = @transform_1, window_bounds = array<i64: 6, 128, 128>}, {pipeline_mode = #tpu.pipeline_mode<synchronous>, transform_indices = @transform_2, window_bounds = array<i64: 6, 1, 128>}, {transform_indices = @transform_3, window_bounds = array<i64: 1, 1, 16>}]} {
    %cst = arith.constant 0.000000e+00 : f32
    %0 = vector.broadcast %cst : f32 to vector<16x128xf32>
    %c0 = arith.constant 0 : index
    %c0_0 = arith.constant 0 : index
    %1 = vector.load %arg5[%c0, %c0_0] : memref<16x128xf32, #tpu.memory_space<vmem>>, vector<16x128xf32>
    tpu.vector_store %arg5[%c0, %c0_0], %0 {strides = array<i32>} : memref<16x128xf32, #tpu.memory_space<vmem>>, vector<16x128xf32>,
    %c0_1 = arith.constant 0 : index
    %c0_2 = arith.constant 0 : index
    %2 = vector.load %arg1[%c0_1, %c0_2] : memref<16x4xf32, #tpu.memory_space<vmem>>, vector<16x4xf32>
    %c0_3 = arith.constant 0 : index
    %c0_4 = arith.constant 0 : index
    %3 = vector.load %arg5[%c0_3, %c0_4] : memref<16x128xf32, #tpu.memory_space<vmem>>, vector<16x4xf32>
    tpu.vector_store %arg5[%c0_3, %c0_4], %2 {strides = array<i32>} : memref<16x128xf32, #tpu.memory_space<vmem>>, vector<16x4xf32>,
    %c0_5 = arith.constant 0 : index
    %c0_6 = arith.constant 0 : index
    %4 = vector.load %arg5[%c0_5, %c0_6] : memref<16x128xf32, #tpu.memory_space<vmem>>, vector<16x128xf32>
    %5 = arith.truncf %4 : vector<16x128xf32> to vector<16x128xbf16>
    %c0_7 = arith.constant 0 : index
    %c0_8 = arith.constant 0 : index
    %c0_9 = arith.constant 0 : index
    %6 = vector.load %arg2[%c0_7, %c0_8, %c0_9] : memref<6x128x128xbf16, #tpu.memory_space<vmem>>, vector<1x128x128xbf16>
    %7 = vector.shape_cast %6 : vector<1x128x128xbf16> to vector<128x128xbf16>
    %cst_10 = arith.constant dense<0.000000e+00> : vector<16x128xf32>
    %8 = tpu.matmul %5, %7, %cst_10 {dimension_numbers = #tpu.dot_dimension_numbers<[1], [0], [0], [1], [0, 0, 1, 1], [], []>} : vector<16x128xbf16>, vector<128x128xbf16>, vector<16x128xf32> -> vector<16x128xf32>
    %c0_11 = arith.constant 0 : index
    %c0_12 = arith.constant 0 : index
    %c0_13 = arith.constant 0 : index
    %9 = vector.load %arg3[%c0_11, %c0_12, %c0_13] : memref<6x1x128xf32, #tpu.memory_space<vmem>>, vector<1x1x128xf32>
    %10 = vector.shape_cast %9 : vector<1x1x128xf32> to vector<1x128xf32>
    %11 = vector.broadcast %10 : vector<1x128xf32> to vector<16x128xf32>
    %12 = arith.addf %8, %11 : vector<16x128xf32>
    %13 = arith.negf %12 : vector<16x128xf32>
    %14 = math.exp %13 : vector<16x128xf32>
    %cst_14 = arith.constant 1.000000e+00 : f32
    %15 = vector.broadcast %cst_14 : f32 to vector<16x128xf32>
    %16 = arith.addf %15, %14 : vector<16x128xf32>
    %17 = arith.divf %15, %16 : vector<16x128xf32>
    %18 = arith.truncf %17 : vector<16x128xf32> to vector<16x128xbf16>
    %c1 = arith.constant 1 : index
    %c0_15 = arith.constant 0 : index
    %c0_16 = arith.constant 0 : index
    %19 = vector.load %arg2[%c1, %c0_15, %c0_16] : memref<6x128x128xbf16, #tpu.memory_space<vmem>>, vector<1x128x128xbf16>
    %20 = vector.shape_cast %19 : vector<1x128x128xbf16> to vector<128x128xbf16>
    %cst_17 = arith.constant dense<0.000000e+00> : vector<16x128xf32>
    %21 = tpu.matmul %18, %20, %cst_17 {dimension_numbers = #tpu.dot_dimension_numbers<[1], [0], [0], [1], [0, 0, 1, 1], [], []>} : vector<16x128xbf16>, vector<128x128xbf16>, vector<16x128xf32> -> vector<16x128xf32>
    %c1_18 = arith.constant 1 : index
    %c0_19 = arith.constant 0 : index
    %c0_20 = arith.constant 0 : index
    %22 = vector.load %arg3[%c1_18, %c0_19, %c0_20] : memref<6x1x128xf32, #tpu.memory_space<vmem>>, vector<1x1x128xf32>
    %23 = vector.shape_cast %22 : vector<1x1x128xf32> to vector<1x128xf32>
    %24 = vector.broadcast %23 : vector<1x128xf32> to vector<16x128xf32>
    %25 = arith.addf %21, %24 : vector<16x128xf32>
    %26 = arith.negf %25 : vector<16x128xf32>
    %27 = math.exp %26 : vector<16x128xf32>
    %cst_21 = arith.constant 1.000000e+00 : f32
    %28 = vector.broadcast %cst_21 : f32 to vector<16x128xf32>
    %29 = arith.addf %28, %27 : vector<16x128xf32>
    %30 = arith.divf %28, %29 : vector<16x128xf32>
    %31 = arith.truncf %30 : vector<16x128xf32> to vector<16x128xbf16>
    %c2 = arith.constant 2 : index
    %c0_22 = arith.constant 0 : index
    %c0_23 = arith.constant 0 : index
    %32 = vector.load %arg2[%c2, %c0_22, %c0_23] : memref<6x128x128xbf16, #tpu.memory_space<vmem>>, vector<1x128x128xbf16>
    %33 = vector.shape_cast %32 : vector<1x128x128xbf16> to vector<128x128xbf16>
    %cst_24 = arith.constant dense<0.000000e+00> : vector<16x128xf32>
    %34 = tpu.matmul %31, %33, %cst_24 {dimension_numbers = #tpu.dot_dimension_numbers<[1], [0], [0], [1], [0, 0, 1, 1], [], []>} : vector<16x128xbf16>, vector<128x128xbf16>, vector<16x128xf32> -> vector<16x128xf32>
    %c2_25 = arith.constant 2 : index
    %c0_26 = arith.constant 0 : index
    %c0_27 = arith.constant 0 : index
    %35 = vector.load %arg3[%c2_25, %c0_26, %c0_27] : memref<6x1x128xf32, #tpu.memory_space<vmem>>, vector<1x1x128xf32>
    %36 = vector.shape_cast %35 : vector<1x1x128xf32> to vector<1x128xf32>
    %37 = vector.broadcast %36 : vector<1x128xf32> to vector<16x128xf32>
    %38 = arith.addf %34, %37 : vector<16x128xf32>
    %39 = arith.negf %38 : vector<16x128xf32>
    %40 = math.exp %39 : vector<16x128xf32>
    %cst_28 = arith.constant 1.000000e+00 : f32
    %41 = vector.broadcast %cst_28 : f32 to vector<16x128xf32>
    %42 = arith.addf %41, %40 : vector<16x128xf32>
    %43 = arith.divf %41, %42 : vector<16x128xf32>
    %44 = arith.truncf %43 : vector<16x128xf32> to vector<16x128xbf16>
    %c3 = arith.constant 3 : index
    %c0_29 = arith.constant 0 : index
    %c0_30 = arith.constant 0 : index
    %45 = vector.load %arg2[%c3, %c0_29, %c0_30] : memref<6x128x128xbf16, #tpu.memory_space<vmem>>, vector<1x128x128xbf16>
    %46 = vector.shape_cast %45 : vector<1x128x128xbf16> to vector<128x128xbf16>
    %cst_31 = arith.constant dense<0.000000e+00> : vector<16x128xf32>
    %47 = tpu.matmul %44, %46, %cst_31 {dimension_numbers = #tpu.dot_dimension_numbers<[1], [0], [0], [1], [0, 0, 1, 1], [], []>} : vector<16x128xbf16>, vector<128x128xbf16>, vector<16x128xf32> -> vector<16x128xf32>
    %c3_32 = arith.constant 3 : index
    %c0_33 = arith.constant 0 : index
    %c0_34 = arith.constant 0 : index
    %48 = vector.load %arg3[%c3_32, %c0_33, %c0_34] : memref<6x1x128xf32, #tpu.memory_space<vmem>>, vector<1x1x128xf32>
    %49 = vector.shape_cast %48 : vector<1x1x128xf32> to vector<1x128xf32>
    %50 = vector.broadcast %49 : vector<1x128xf32> to vector<16x128xf32>
    %51 = arith.addf %47, %50 : vector<16x128xf32>
    %52 = arith.negf %51 : vector<16x128xf32>
    %53 = math.exp %52 : vector<16x128xf32>
    %cst_35 = arith.constant 1.000000e+00 : f32
    %54 = vector.broadcast %cst_35 : f32 to vector<16x128xf32>
    %55 = arith.addf %54, %53 : vector<16x128xf32>
    %56 = arith.divf %54, %55 : vector<16x128xf32>
    %57 = arith.truncf %56 : vector<16x128xf32> to vector<16x128xbf16>
    %c4 = arith.constant 4 : index
    %c0_36 = arith.constant 0 : index
    %c0_37 = arith.constant 0 : index
    %58 = vector.load %arg2[%c4, %c0_36, %c0_37] : memref<6x128x128xbf16, #tpu.memory_space<vmem>>, vector<1x128x128xbf16>
    %59 = vector.shape_cast %58 : vector<1x128x128xbf16> to vector<128x128xbf16>
    %cst_38 = arith.constant dense<0.000000e+00> : vector<16x128xf32>
    %60 = tpu.matmul %57, %59, %cst_38 {dimension_numbers = #tpu.dot_dimension_numbers<[1], [0], [0], [1], [0, 0, 1, 1], [], []>} : vector<16x128xbf16>, vector<128x128xbf16>, vector<16x128xf32> -> vector<16x128xf32>
    %c4_39 = arith.constant 4 : index
    %c0_40 = arith.constant 0 : index
    %c0_41 = arith.constant 0 : index
    %61 = vector.load %arg3[%c4_39, %c0_40, %c0_41] : memref<6x1x128xf32, #tpu.memory_space<vmem>>, vector<1x1x128xf32>
    %62 = vector.shape_cast %61 : vector<1x1x128xf32> to vector<1x128xf32>
    %63 = vector.broadcast %62 : vector<1x128xf32> to vector<16x128xf32>
    %64 = arith.addf %60, %63 : vector<16x128xf32>
    %65 = arith.negf %64 : vector<16x128xf32>
    %66 = math.exp %65 : vector<16x128xf32>
    %cst_42 = arith.constant 1.000000e+00 : f32
    %67 = vector.broadcast %cst_42 : f32 to vector<16x128xf32>
    %68 = arith.addf %67, %66 : vector<16x128xf32>
    %69 = arith.divf %67, %68 : vector<16x128xf32>
    %70 = arith.truncf %69 : vector<16x128xf32> to vector<16x128xbf16>
    %c5 = arith.constant 5 : index
    %c0_43 = arith.constant 0 : index
    %c0_44 = arith.constant 0 : index
    %71 = vector.load %arg2[%c5, %c0_43, %c0_44] : memref<6x128x128xbf16, #tpu.memory_space<vmem>>, vector<1x128x128xbf16>
    %72 = vector.shape_cast %71 : vector<1x128x128xbf16> to vector<128x128xbf16>
    %cst_45 = arith.constant dense<0.000000e+00> : vector<16x128xf32>
    %73 = tpu.matmul %70, %72, %cst_45 {dimension_numbers = #tpu.dot_dimension_numbers<[1], [0], [0], [1], [0, 0, 1, 1], [], []>} : vector<16x128xbf16>, vector<128x128xbf16>, vector<16x128xf32> -> vector<16x128xf32>
    %c5_46 = arith.constant 5 : index
    %c0_47 = arith.constant 0 : index
    %c0_48 = arith.constant 0 : index
    %74 = vector.load %arg3[%c5_46, %c0_47, %c0_48] : memref<6x1x128xf32, #tpu.memory_space<vmem>>, vector<1x1x128xf32>
    %75 = vector.shape_cast %74 : vector<1x1x128xf32> to vector<1x128xf32>
    %76 = vector.broadcast %75 : vector<1x128xf32> to vector<16x128xf32>
    %77 = arith.addf %73, %76 : vector<16x128xf32>
    %78 = tpu.transpose %77, [1, 0] : vector<16x128xf32> -> vector<128x16xf32>
    %79 = vector.extract_strided_slice %78 {offsets = [0, 0], sizes = [1, 16], strides = [1, 1]} : vector<128x16xf32> to vector<1x16xf32>
    %c0_49 = arith.constant 0 : index
    %c0_50 = arith.constant 0 : index
    %c0_51 = arith.constant 0 : index
    %80 = vector.load %arg4[%c0_49, %c0_50, %c0_51] : memref<1x1x16xf32, #tpu.memory_space<vmem>>, vector<1x1x16xf32>
    %81 = vector.shape_cast %80 : vector<1x1x16xf32> to vector<1x16xf32>
    %82 = vector.shape_cast %79 : vector<1x16xf32> to vector<1x1x16xf32>
    tpu.vector_store %arg4[%c0_49, %c0_50, %c0_51], %82 {strides = array<i32>} : memref<1x1x16xf32, #tpu.memory_space<vmem>>, vector<1x1x16xf32>,
    return
  }
  func.func @transform_0(%arg0: i32) -> (i32, i32) {
    %c0_i32 = arith.constant 0 : i32
    %c0_i32_0 = arith.constant 0 : i32
    return %arg0, %c0_i32 : i32, i32
  }
  func.func @transform_1(%arg0: i32) -> (i32, i32, i32) {
    %c0_i32 = arith.constant 0 : i32
    %c0_i32_0 = arith.constant 0 : i32
    %c0_i32_1 = arith.constant 0 : i32
    %c0_i32_2 = arith.constant 0 : i32
    return %c0_i32, %c0_i32_0, %c0_i32_1 : i32, i32, i32
  }
  func.func @transform_2(%arg0: i32) -> (i32, i32, i32) {
    %c0_i32 = arith.constant 0 : i32
    %c0_i32_0 = arith.constant 0 : i32
    %c0_i32_1 = arith.constant 0 : i32
    %c0_i32_2 = arith.constant 0 : i32
    return %c0_i32, %c0_i32_0, %c0_i32_1 : i32, i32, i32
  }
  func.func @transform_3(%arg0: i32) -> (i32, i32, i32) {
    %c0_i32 = arith.constant 0 : i32
    %c0_i32_0 = arith.constant 0 : i32
    %c0_i32_1 = arith.constant 0 : i32
    return %arg0, %c0_i32, %c0_i32_0 : i32, i32, i32
  }
}

</mosaic_0001>

<llo_original>
// kernel: mlp_forward.1
$region0: #{mlp_forward.1}
  #allocation0 [shape = 'u32[]', space=smem, size = 0x4, offset = 0x4, fixed_abs, tag = 'smem constant byte address 0x4 - core index']
  #allocation1 [shape = 'u32[72,128]{1,0:T(1,128)}', space=vmem, size = 0x9000, scoped, tag = 'internal scratch']
  #allocation2 [shape = 'f32[16,128]{1,0:T(8,128)}', space=vmem, size = 0x2000, scoped, tag = 'scratch operand']
  %s0 = inlined_call_operand.vmem [shape: f32[32,4], index: 0, kind: input, shape index: {}]
  %s1 = inlined_call_operand.hbm [shape: bf16[6,128,128], index: 1, kind: input, shape index: {}]
  %s2 = inlined_call_operand.vmem [shape: f32[6,1,128], index: 2, kind: input, shape index: {}]
  %s3 = inlined_call_operand.vmem [shape: f32[2,1,16], index: 3, kind: output, shape index: {}]
  %s4 = sld [smem:[#allocation0]]
  $region49: #{mlp_forward.1} parent=0
    _
  %s6 = ssub.s32 1, %s4
  %s7 = scalar_select 0, %s6, %s4
  $region1: #{mlp_forward.1} parent=0
    #allocation3 [shape = 'u8[196608]{0}', space=vmem, size = 0x30000, scoped, tag = 'input window, operand 1, single buffered']
    #allocation4 [shape = 's32[2]{0}', space=sflag, size = 0x8, scoped, tag = 'scoped memory for mlp_forward.1']
    %8 = vsyncpa [#allocation4], 0
    loop: start=0, step=1, limit=4
    $region2: #{mlp_forward.1} parent=1 // loop_pre_header
      _
    $region3: #{mlp_forward.1} parent=1 // loop_header
      %s10 = sphi 0, %s14
      %p11 = scmp.ge.s32.totalorder %s10, 4
      %s20 = sphi 0, %s22
      %s23 = sphi 0, %s20
      %s24 = sphi 0, %s23
      %s40 = sphi 0, %s24
      %s44 = sphi 0, %s44
      %s46 = sphi 0, %s44
      %s47 = sphi 0, %s46
      %s61 = sphi 0, %s47
      %s65 = sphi 0, %s65
      %s67 = sphi 0, %s65
      %s68 = sphi 0, %s67
      %s82 = sphi 0, %s68
      %s88 = sphi 0, %s90
      %s91 = sphi 0, %s88
      %s92 = sphi 0, %s91
      %s108 = sphi 0, %s92
    $region4: #{mlp_forward.1} parent=1 // loop_header_branch
      %13 = sbr.rel (%p11) target = $region8
    $region5: #{mlp_forward.1} parent=1 // loop_body
      %s15 = ssub.s32 %s10, 1
      %s16 = ssub.s32 %s10, 2
      %s17 = sadd.s32 %s10, 1
      %s18 = ssub.s32 %s10, %s17
      %p19 = scmp.eq.s32.totalorder %s18, 0
      %s21 = sadd.s32 %s20, 1
      %s22 = scalar_select %p19, %s20, %s21
      %p25 = pneg %p19
      %p26 = scmp.eq.s32.totalorder %s10, 1
      %p27 = por %p25, %p26
      %p28 = scmp.ne.s32.totalorder %s20, %s23
      %p29 = scmp.eq.s32.totalorder %s10, 0
      %p30 = por %p28, %p29
      %p31 = scmp.ne.s32.totalorder %s20, %s23
      %p32 = scmp.eq.s32.totalorder %s15, 1
      %p33 = por %p31, %p32
      %p34 = scmp.ne.s32.totalorder %s23, %s24
      %p35 = scmp.eq.s32.totalorder %s15, 0
      %p36 = por %p34, %p35
      %p37 = scmp.ne.s32.totalorder %s23, %s24
      %p38 = scmp.eq.s32.totalorder %s16, 1
      %p39 = por %p37, %p38
      %p41 = scmp.ne.s32.totalorder %s24, %s40
      %p42 = scmp.eq.s32.totalorder %s16, 0
      %p43 = por %p41, %p42
      %s45 = sadd.s32 %s44, 1
      %p48 = scmp.eq.s32.totalorder %s10, 1
      %p49 = scmp.ne.s32.totalorder %s44, %s46
      %p50 = scmp.eq.s32.totalorder %s10, 0
      %p51 = por %p49, %p50
      %p52 = scmp.ne.s32.totalorder %s44, %s46
      %p53 = scmp.eq.s32.totalorder %s15, 1
      %p54 = por %p52, %p53
      %p55 = scmp.ne.s32.totalorder %s46, %s47
      %p56 = scmp.eq.s32.totalorder %s15, 0
      %p57 = por %p55, %p56
      %p58 = scmp.ne.s32.totalorder %s46, %s47
      %p59 = scmp.eq.s32.totalorder %s16, 1
      %p60 = por %p58, %p59
      %p62 = scmp.ne.s32.totalorder %s47, %s61
      %p63 = scmp.eq.s32.totalorder %s16, 0
      %p64 = por %p62, %p63
      %s66 = sadd.s32 %s65, 1
      %p69 = scmp.eq.s32.totalorder %s10, 1
      %p70 = scmp.ne.s32.totalorder %s65, %s67
      %p71 = scmp.eq.s32.totalorder %s10, 0
      %p72 = por %p70, %p71
      %p73 = scmp.ne.s32.totalorder %s65, %s67
      %p74 = scmp.eq.s32.totalorder %s15, 1
      %p75 = por %p73, %p74
      %p76 = scmp.ne.s32.totalorder %s67, %s68
      %p77 = scmp.eq.s32.totalorder %s15, 0
      %p78 = por %p76, %p77
      %p79 = scmp.ne.s32.totalorder %s67, %s68
      %p80 = scmp.eq.s32.totalorder %s16, 1
      %p81 = por %p79, %p80
      %p83 = scmp.ne.s32.totalorder %s68, %s82
      %p84 = scmp.eq.s32.totalorder %s16, 0
      %p85 = por %p83, %p84
      %s86 = ssub.s32 %s10, %s17
      %p87 = scmp.eq.s32.totalorder %s86, 0
      %s89 = sadd.s32 %s88, 1
      %s90 = scalar_select %p87, %s88, %s89
      %p93 = pneg %p87
      %p94 = scmp.eq.s32.totalorder %s10, 1
      %p95 = por %p93, %p94
      %p96 = scmp.ne.s32.totalorder %s88, %s91
      %p97 = scmp.eq.s32.totalorder %s10, 0
      %p98 = por %p96, %p97
      %p99 = scmp.ne.s32.totalorder %s88, %s91
      %p100 = scmp.eq.s32.totalorder %s15, 1
      %p101 = por %p99, %p100
      %p102 = scmp.ne.s32.totalorder %s91, %s92
      %p103 = scmp.eq.s32.totalorder %s15, 0
      %p104 = por %p102, %p103
      %p105 = scmp.ne.s32.totalorder %s91, %s92
      %p106 = scmp.eq.s32.totalorder %s16, 1
      %p107 = por %p105, %p106
      %p109 = scmp.ne.s32.totalorder %s92, %s108
      %p110 = scmp.eq.s32.totalorder %s16, 0
      %p111 = por %p109, %p110
      %p112 = scmp.le.s32.totalorder 1, %s10
      %p113 = scmp.lt.s32.totalorder %s10, 3
      %p114 = pnand %p112, %p113
      %p115 = pneg %p114
      // Predicated region
      $region9: #{mlp_forward.1} parent=5 // pred_check
        _
      $region10: #{mlp_forward.1} parent=5 // pred_check_branch
        %117 = sbr.rel (%p114) target = $region12
      $region11: #{mlp_forward.1} parent=5 // pred_region
        %s118 = ssub.s32 %s10, 1
        // Predicated region
        $region13: #{mlp_forward.1} parent=11 // pred_check
          %p119 = pneg %p57
        $region14: #{mlp_forward.1} parent=11 // pred_check_branch
          %121 = sbr.rel (%p119) target = $region16
        $region15: #{mlp_forward.1} parent=11 // pred_region
          %123 = vsyncadd [#allocation4], 0
          %s124 = sshll.u32 %s1, 4
          %s125 = int_to_ptr.hbm [resolvable:$true] %s124
          %s126 = sshll.u32 [#allocation3], 4
          %s127 = int_to_ptr.vmem [resolvable:$true] %s126
          %132 = dma.hbm_to_vmem [thread:$0]  %s125, 6144, %s127, [#allocation4], 64, 64, 4
        $region16: #{mlp_forward.1} parent=11 // pred_fallthru
          _
        // Predicated region
        $region17: #{mlp_forward.1} parent=11 // pred_check
          %p133 = pneg %p78
        $region18: #{mlp_forward.1} parent=11 // pred_check_branch
          %135 = sbr.rel (%p133) target = $region20
        $region19: #{mlp_forward.1} parent=11 // pred_region
          _
        $region20: #{mlp_forward.1} parent=11 // pred_fallthru
          _
      $region12: #{mlp_forward.1} parent=5 // pred_fallthru
        _
      %p136 = scmp.lt.s32.totalorder %s10, 2
      // Predicated region
      $region21: #{mlp_forward.1} parent=5 // pred_check
        %p137 = pneg %p136
      $region22: #{mlp_forward.1} parent=5 // pred_check_branch
        %139 = sbr.rel (%p137) target = $region24
      $region23: #{mlp_forward.1} parent=5 // pred_region
        // Predicated region
        $region25: #{mlp_forward.1} parent=23 // pred_check
          %p140 = pneg %p30
        $region26: #{mlp_forward.1} parent=23 // pred_check_branch
          %142 = sbr.rel (%p140) target = $region28
        $region27: #{mlp_forward.1} parent=23 // pred_region
          %s143 = smul.u32 2, %s10
          %p144 = scmp.lt.s32.totalorder %s143, 3
          %s145 = scalar_select %p144, %s143, 3
          %s146 = smul.addr %s145, 8
          %s147 = scalar_lea.vmem %s0, %s146
          %s148 = smul.u32 2, %s10
        $region28: #{mlp_forward.1} parent=23 // pred_fallthru
          _
      $region24: #{mlp_forward.1} parent=5 // pred_fallthru
        _
      %p149 = scmp.le.s32.totalorder 1, %s10
      %p150 = scmp.lt.s32.totalorder %s10, 3
      %p151 = pnand %p149, %p150
      %p152 = pneg %p151
      // Predicated region
      $region29: #{mlp_forward.1} parent=5 // pred_check
        _
      $region30: #{mlp_forward.1} parent=5 // pred_check_branch
        %154 = sbr.rel (%p151) target = $region32
      $region31: #{mlp_forward.1} parent=5 // pred_region
        %s155 = ssub.s32 %s10, 1
        // Predicated region
        $region33: #{mlp_forward.1} parent=31 // pred_check
          %p156 = pneg %p57
        $region34: #{mlp_forward.1} parent=31 // pred_check_branch
          %158 = sbr.rel (%p156) target = $region36
        $region35: #{mlp_forward.1} parent=31 // pred_region
          %160 = dma.done [#allocation4], 6144
        $region36: #{mlp_forward.1} parent=31 // pred_fallthru
          _
        %s161 = smul.u32 2, %s15
        %p162 = scmp.lt.s32.totalorder %s161, 3
        %s163 = scalar_select %p162, %s161, 3
        %s164 = smul.addr %s163, 8
        %s165 = scalar_lea.vmem %s0, %s164
        %p166 = pneg %p36
        %p167 = pneg %p33
        %p168 = pneg %p57
        %p169 = pneg %p54
        %p170 = pneg %p78
        %p171 = pneg %p75
        %p172 = pneg %p104
        %p173 = pneg %p101
        %p174 = scmp.lt.s32.totalorder %s15, 1
        %s175 = scalar_select %p174, %s15, 1
        %s176 = scalar_lea.vmem %s3, %s175
        %s177 = smul.u32 2, %s15
        %p178 = scmp.lt.s32.totalorder %s177, 3
        %s179 = scalar_select %p178, %s177, 3
        %s180 = smul.addr %s179, 8
        %s181 = scalar_lea.vmem %s0, %s180
        %s182 = smul.u32 2, %s15
        %p183 = scmp.lt.s32.totalorder %s15, 1
        %s184 = scalar_select %p183, %s15, 1
        %s185 = scalar_lea.vmem %s3, %s184
        %186 = vst [vmem:[#allocation2] sm:$0xff] 0.0
        %187 = vst [vmem:[#allocation2 + $0x8] sm:$0xff] 0.0
        %v188 = vld [vmem:[%s181] sm:$0xff]
        %v189 = vld [vmem:[%s181 + $0x8] sm:$0xff]
        %vm190 = vcmask 31744
        %191 = vst.msk [vmem:[#allocation2] sm:$0xff] %vm190, %v188
        %192 = vst.msk [vmem:[#allocation2 + $0x8] sm:$0xff] %vm190, %v189
        %v193 = vld [vmem:[#allocation2] sm:$0xff]
        %v194 = vld [vmem:[#allocation2 + $0x8] sm:$0xff]
        %v195 = vpack.c.bf16 %v194, %v193
        %v196 = vld [vmem:[#allocation3] sm:$0xf]
        %v197 = vld [vmem:[#allocation3 + $0x4] sm:$0xf]
        %v198 = vld [vmem:[#allocation3 + $0x8] sm:$0xf]
        %v199 = vld [vmem:[#allocation3 + $0xc] sm:$0xf]
        %v200 = vld [vmem:[#allocation3 + $0x10] sm:$0xf]
        %v201 = vld [vmem:[#allocation3 + $0x14] sm:$0xf]
        %v202 = vld [vmem:[#allocation3 + $0x18] sm:$0xf]
        %v203 = vld [vmem:[#allocation3 + $0x1c] sm:$0xf]
        %v204 = vld [vmem:[#allocation3 + $0x20] sm:$0xf]
        %v205 = vld [vmem:[#allocation3 + $0x24] sm:$0xf]
        %v206 = vld [vmem:[#allocation3 + $0x28] sm:$0xf]
        %v207 = vld [vmem:[#allocation3 + $0x2c] sm:$0xf]
        %v208 = vld [vmem:[#allocation3 + $0x30] sm:$0xf]
        %v209 = vld [vmem:[#allocation3 + $0x34] sm:$0xf]
        %v210 = vld [vmem:[#allocation3 + $0x38] sm:$0xf]
        %v211 = vld [vmem:[#allocation3 + $0x3c] sm:$0xf]
        %v212 = vld [vmem:[%s2] sm:$0x1]
        %v214 = vperm.slane %v212, 0
        %v232 = vunpack.c.l.b16 %v196
        %v233 = vunpack.c.l.b16 %v197
        %v234 = vunpack.c.l.b16 %v198
        %v235 = vunpack.c.l.b16 %v199
        %v236 = vunpack.c.l.b16 %v200
        %v237 = vunpack.c.l.b16 %v201
        %v238 = vunpack.c.l.b16 %v202
        %v239 = vunpack.c.l.b16 %v203
        %v240 = vunpack.c.l.b16 %v204
        %v241 = vunpack.c.l.b16 %v205
        %v242 = vunpack.c.l.b16 %v206
        %v243 = vunpack.c.l.b16 %v207
        %v244 = vunpack.c.l.b16 %v208
        %v245 = vunpack.c.l.b16 %v209
        %v246 = vunpack.c.l.b16 %v210
        %v247 = vunpack.c.l.b16 %v211
        %v248 = vpack.c.b16 %v233, %v232
        %v249 = vpack.c.b16 %v235, %v234
        %v250 = vpack.c.b16 %v237, %v236
        %v251 = vpack.c.b16 %v239, %v238
        %v252 = vpack.c.b16 %v241, %v240
        %v253 = vpack.c.b16 %v243, %v242
        %v254 = vpack.c.b16 %v245, %v244
        %v255 = vpack.c.b16 %v247, %v246
        %264 = vmatpush.bf16.msra.mxu0 %v255
        %265 = vmatpush.bf16.msra.mxu0 %v254
        %266 = vmatpush.bf16.msra.mxu0 %v253
        %267 = vmatpush.bf16.msra.mxu0 %v252
        %268 = vmatpush.bf16.msra.mxu0 %v251
        %269 = vmatpush.bf16.msra.mxu0 %v250
        %270 = vmatpush.bf16.msra.mxu0 %v249
        %271 = vmatpush.bf16.msra.mxu0 %v248
        %272 = vmatmul.bf16.gmra.mxu0 %v195
        %v273 = vpop.f32.mrf.mxu0
        %v274 = vadd.f32 %v214, %v273
        %v275 = vpop.f32.mrf.mxu0
        %v276 = vadd.f32 %v214, %v275
        %277 = vdwg.mxu0
        %v278 = vxor.u32 %v274, 2147483648
        %v279 = vxor.u32 %v276, 2147483648
        %v280 = vmul.f32 %v278, 1.442695
        %v281 = vpow.pop %v280
        %v282 = vmul.f32 %v279, 1.442695
        %v283 = vpow.pop %v282
        %v284 = vadd.f32 %v281, 1.0
        %v285 = vadd.f32 %v283, 1.0
        %v286 = vrcp.pop %v284
        %v287 = vmul.f32 %v284, %v286
        %v288 = vsub.f32 1.0, %v287
        %v289 = vmul.f32 %v286, %v288
        %v290 = vadd.f32 %v286, %v289
        %vm291 = vweird.f32 %v284
        %vm292 = vweird.f32 %v286
        %vm293 = vmor %vm291, %vm292
        %v294 = vsel %vm293, %v286, %v290
        %v295 = vand.u32 2147483647, %v284
        %vm296 = vcmp.eq.f32.partialorder %v295, 8.507059e+37
        %v297 = vand.u32 %v284, 2147483648
        %v298 = vor.u32 1.1754944e-38, %v297
        %v299 = vsel %vm296, %v298, %v294
        %v300 = vmul.f32 1.0, %v299
        %v301 = vrcp.pop %v285
        %v302 = vmul.f32 %v285, %v301
        %v303 = vsub.f32 1.0, %v302
        %v304 = vmul.f32 %v301, %v303
        %v305 = vadd.f32 %v301, %v304
        %vm306 = vweird.f32 %v285
        %vm307 = vweird.f32 %v301
        %vm308 = vmor %vm306, %vm307
        %v309 = vsel %vm308, %v301, %v305
        %v310 = vand.u32 2147483647, %v285
        %vm311 = vcmp.eq.f32.partialorder %v310, 8.507059e+37
        %v312 = vand.u32 %v285, 2147483648
        %v313 = vor.u32 1.1754944e-38, %v312
        %v314 = vsel %vm311, %v313, %v309
        %v315 = vmul.f32 1.0, %v314
        %v316 = vpack.c.bf16 %v315, %v300
        %s317 = scalar_lea.vmem [#allocation3], 64
        %v318 = vld [vmem:[%s317] sm:$0xf]
        %v319 = vld [vmem:[%s317 + $0x4] sm:$0xf]
        %v320 = vld [vmem:[%s317 + $0x8] sm:$0xf]
        %v321 = vld [vmem:[%s317 + $0xc] sm:$0xf]
        %v322 = vld [vmem:[%s317 + $0x10] sm:$0xf]
        %v323 = vld [vmem:[%s317 + $0x14] sm:$0xf]
        %v324 = vld [vmem:[%s317 + $0x18] sm:$0xf]
        %v325 = vld [vmem:[%s317 + $0x1c] sm:$0xf]
        %v326 = vld [vmem:[%s317 + $0x20] sm:$0xf]
        %v327 = vld [vmem:[%s317 + $0x24] sm:$0xf]
        %v328 = vld [vmem:[%s317 + $0x28] sm:$0xf]
        %v329 = vld [vmem:[%s317 + $0x2c] sm:$0xf]
        %v330 = vld [vmem:[%s317 + $0x30] sm:$0xf]
        %v331 = vld [vmem:[%s317 + $0x34] sm:$0xf]
        %v332 = vld [vmem:[%s317 + $0x38] sm:$0xf]
        %v333 = vld [vmem:[%s317 + $0x3c] sm:$0xf]
        %s334 = scalar_lea.vmem %s2, 1
        %v335 = vld [vmem:[%s334] sm:$0x1]
        %v337 = vperm.slane %v335, 0
        %v355 = vunpack.c.l.b16 %v318
        %v356 = vunpack.c.l.b16 %v319
        %v357 = vunpack.c.l.b16 %v320
        %v358 = vunpack.c.l.b16 %v321
        %v359 = vunpack.c.l.b16 %v322
        %v360 = vunpack.c.l.b16 %v323
        %v361 = vunpack.c.l.b16 %v324
        %v362 = vunpack.c.l.b16 %v325
        %v363 = vunpack.c.l.b16 %v326
        %v364 = vunpack.c.l.b16 %v327
        %v365 = vunpack.c.l.b16 %v328
        %v366 = vunpack.c.l.b16 %v329
        %v367 = vunpack.c.l.b16 %v330
        %v368 = vunpack.c.l.b16 %v331
        %v369 = vunpack.c.l.b16 %v332
        %v370 = vunpack.c.l.b16 %v333
        %v371 = vpack.c.b16 %v356, %v355
        %v372 = vpack.c.b16 %v358, %v357
        %v373 = vpack.c.b16 %v360, %v359
        %v374 = vpack.c.b16 %v362, %v361
        %v375 = vpack.c.b16 %v364, %v363
        %v376 = vpack.c.b16 %v366, %v365
        %v377 = vpack.c.b16 %v368, %v367
        %v378 = vpack.c.b16 %v370, %v369
        %387 = vmatpush.bf16.msra.mxu0 %v378
        %388 = vmatpush.bf16.msra.mxu0 %v377
        %389 = vmatpush.bf16.msra.mxu0 %v376
        %390 = vmatpush.bf16.msra.mxu0 %v375
        %391 = vmatpush.bf16.msra.mxu0 %v374
        %392 = vmatpush.bf16.msra.mxu0 %v373
        %393 = vmatpush.bf16.msra.mxu0 %v372
        %394 = vmatpush.bf16.msra.mxu0 %v371
        %395 = vmatmul.bf16.gmra.mxu0 %v316
        %v396 = vpop.f32.mrf.mxu0
        %v397 = vadd.f32 %v337, %v396
        %v398 = vpop.f32.mrf.mxu0
        %v399 = vadd.f32 %v337, %v398
        %400 = vdwg.mxu0
        %v401 = vxor.u32 %v397, 2147483648
        %v402 = vxor.u32 %v399, 2147483648
        %v403 = vmul.f32 %v401, 1.442695
        %v404 = vpow.pop %v403
        %v405 = vmul.f32 %v402, 1.442695
        %v406 = vpow.pop %v405
        %v407 = vadd.f32 %v404, 1.0
        %v408 = vadd.f32 %v406, 1.0
        %v409 = vrcp.pop %v407
        %v410 = vmul.f32 %v407, %v409
        %v411 = vsub.f32 1.0, %v410
        %v412 = vmul.f32 %v409, %v411
        %v413 = vadd.f32 %v409, %v412
        %vm414 = vweird.f32 %v407
        %vm415 = vweird.f32 %v409
        %vm416 = vmor %vm414, %vm415
        %v417 = vsel %vm416, %v409, %v413
        %v418 = vand.u32 2147483647, %v407
        %vm419 = vcmp.eq.f32.partialorder %v418, 8.507059e+37
        %v420 = vand.u32 %v407, 2147483648
        %v421 = vor.u32 1.1754944e-38, %v420
        %v422 = vsel %vm419, %v421, %v417
        %v423 = vmul.f32 1.0, %v422
        %v424 = vrcp.pop %v408
        %v425 = vmul.f32 %v408, %v424
        %v426 = vsub.f32 1.0, %v425
        %v427 = vmul.f32 %v424, %v426
        %v428 = vadd.f32 %v424, %v427
        %vm429 = vweird.f32 %v408
        %vm430 = vweird.f32 %v424
        %vm431 = vmor %vm429, %vm430
        %v432 = vsel %vm431, %v424, %v428
        %v433 = vand.u32 2147483647, %v408
        %vm434 = vcmp.eq.f32.partialorder %v433, 8.507059e+37
        %v435 = vand.u32 %v408, 2147483648
        %v436 = vor.u32 1.1754944e-38, %v435
        %v437 = vsel %vm434, %v436, %v432
        %v438 = vmul.f32 1.0, %v437
        %v439 = vpack.c.bf16 %v438, %v423
        %s440 = scalar_lea.vmem [#allocation3], 128
        %v441 = vld [vmem:[%s440] sm:$0xf]
        %v442 = vld [vmem:[%s440 + $0x4] sm:$0xf]
        %v443 = vld [vmem:[%s440 + $0x8] sm:$0xf]
        %v444 = vld [vmem:[%s440 + $0xc] sm:$0xf]
        %v445 = vld [vmem:[%s440 + $0x10] sm:$0xf]
        %v446 = vld [vmem:[%s440 + $0x14] sm:$0xf]
        %v447 = vld [vmem:[%s440 + $0x18] sm:$0xf]
        %v448 = vld [vmem:[%s440 + $0x1c] sm:$0xf]
        %v449 = vld [vmem:[%s440 + $0x20] sm:$0xf]
        %v450 = vld [vmem:[%s440 + $0x24] sm:$0xf]
        %v451 = vld [vmem:[%s440 + $0x28] sm:$0xf]
        %v452 = vld [vmem:[%s440 + $0x2c] sm:$0xf]
        %v453 = vld [vmem:[%s440 + $0x30] sm:$0xf]
        %v454 = vld [vmem:[%s440 + $0x34] sm:$0xf]
        %v455 = vld [vmem:[%s440 + $0x38] sm:$0xf]
        %v456 = vld [vmem:[%s440 + $0x3c] sm:$0xf]
        %s457 = scalar_lea.vmem %s2, 2
        %v458 = vld [vmem:[%s457] sm:$0x1]
        %v460 = vperm.slane %v458, 0
        %v478 = vunpack.c.l.b16 %v441
        %v479 = vunpack.c.l.b16 %v442
        %v480 = vunpack.c.l.b16 %v443
        %v481 = vunpack.c.l.b16 %v444
        %v482 = vunpack.c.l.b16 %v445
        %v483 = vunpack.c.l.b16 %v446
        %v484 = vunpack.c.l.b16 %v447
        %v485 = vunpack.c.l.b16 %v448
        %v486 = vunpack.c.l.b16 %v449
        %v487 = vunpack.c.l.b16 %v450
        %v488 = vunpack.c.l.b16 %v451
        %v489 = vunpack.c.l.b16 %v452
        %v490 = vunpack.c.l.b16 %v453
        %v491 = vunpack.c.l.b16 %v454
        %v492 = vunpack.c.l.b16 %v455
        %v493 = vunpack.c.l.b16 %v456
        %v494 = vpack.c.b16 %v479, %v478
        %v495 = vpack.c.b16 %v481, %v480
        %v496 = vpack.c.b16 %v483, %v482
        %v497 = vpack.c.b16 %v485, %v484
        %v498 = vpack.c.b16 %v487, %v486
        %v499 = vpack.c.b16 %v489, %v488
        %v500 = vpack.c.b16 %v491, %v490
        %v501 = vpack.c.b16 %v493, %v492
        %510 = vmatpush.bf16.msra.mxu0 %v501
        %511 = vmatpush.bf16.msra.mxu0 %v500
        %512 = vmatpush.bf16.msra.mxu0 %v499
        %513 = vmatpush.bf16.msra.mxu0 %v498
        %514 = vmatpush.bf16.msra.mxu0 %v497
        %515 = vmatpush.bf16.msra.mxu0 %v496
        %516 = vmatpush.bf16.msra.mxu0 %v495
        %517 = vmatpush.bf16.msra.mxu0 %v494
        %518 = vmatmul.bf16.gmra.mxu0 %v439
        %v519 = vpop.f32.mrf.mxu0
        %v520 = vadd.f32 %v460, %v519
        %v521 = vpop.f32.mrf.mxu0
        %v522 = vadd.f32 %v460, %v521
        %523 = vdwg.mxu0
        %v524 = vxor.u32 %v520, 2147483648
        %v525 = vxor.u32 %v522, 2147483648
        %v526 = vmul.f32 %v524, 1.442695
        %v527 = vpow.pop %v526
        %v528 = vmul.f32 %v525, 1.442695
        %v529 = vpow.pop %v528
        %v530 = vadd.f32 %v527, 1.0
        %v531 = vadd.f32 %v529, 1.0
        %v532 = vrcp.pop %v530
        %v533 = vmul.f32 %v530, %v532
        %v534 = vsub.f32 1.0, %v533
        %v535 = vmul.f32 %v532, %v534
        %v536 = vadd.f32 %v532, %v535
        %vm537 = vweird.f32 %v530
        %vm538 = vweird.f32 %v532
        %vm539 = vmor %vm537, %vm538
        %v540 = vsel %vm539, %v532, %v536
        %v541 = vand.u32 2147483647, %v530
        %vm542 = vcmp.eq.f32.partialorder %v541, 8.507059e+37
        %v543 = vand.u32 %v530, 2147483648
        %v544 = vor.u32 1.1754944e-38, %v543
        %v545 = vsel %vm542, %v544, %v540
        %v546 = vmul.f32 1.0, %v545
        %v547 = vrcp.pop %v531
        %v548 = vmul.f32 %v531, %v547
        %v549 = vsub.f32 1.0, %v548
        %v550 = vmul.f32 %v547, %v549
        %v551 = vadd.f32 %v547, %v550
        %vm552 = vweird.f32 %v531
        %vm553 = vweird.f32 %v547
        %vm554 = vmor %vm552, %vm553
        %v555 = vsel %vm554, %v547, %v551
        %v556 = vand.u32 2147483647, %v531
        %vm557 = vcmp.eq.f32.partialorder %v556, 8.507059e+37
        %v558 = vand.u32 %v531, 2147483648
        %v559 = vor.u32 1.1754944e-38, %v558
        %v560 = vsel %vm557, %v559, %v555
        %v561 = vmul.f32 1.0, %v560
        %v562 = vpack.c.bf16 %v561, %v546
        %s563 = scalar_lea.vmem [#allocation3], 192
        %v564 = vld [vmem:[%s563] sm:$0xf]
        %v565 = vld [vmem:[%s563 + $0x4] sm:$0xf]
        %v566 = vld [vmem:[%s563 + $0x8] sm:$0xf]
        %v567 = vld [vmem:[%s563 + $0xc] sm:$0xf]
        %v568 = vld [vmem:[%s563 + $0x10] sm:$0xf]
        %v569 = vld [vmem:[%s563 + $0x14] sm:$0xf]
        %v570 = vld [vmem:[%s563 + $0x18] sm:$0xf]
        %v571 = vld [vmem:[%s563 + $0x1c] sm:$0xf]
        %v572 = vld [vmem:[%s563 + $0x20] sm:$0xf]
        %v573 = vld [vmem:[%s563 + $0x24] sm:$0xf]
        %v574 = vld [vmem:[%s563 + $0x28] sm:$0xf]
        %v575 = vld [vmem:[%s563 + $0x2c] sm:$0xf]
        %v576 = vld [vmem:[%s563 + $0x30] sm:$0xf]
        %v577 = vld [vmem:[%s563 + $0x34] sm:$0xf]
        %v578 = vld [vmem:[%s563 + $0x38] sm:$0xf]
        %v579 = vld [vmem:[%s563 + $0x3c] sm:$0xf]
        %s580 = scalar_lea.vmem %s2, 3
        %v581 = vld [vmem:[%s580] sm:$0x1]
        %v583 = vperm.slane %v581, 0
        %v601 = vunpack.c.l.b16 %v564
        %v602 = vunpack.c.l.b16 %v565
        %v603 = vunpack.c.l.b16 %v566
        %v604 = vunpack.c.l.b16 %v567
        %v605 = vunpack.c.l.b16 %v568
        %v606 = vunpack.c.l.b16 %v569
        %v607 = vunpack.c.l.b16 %v570
        %v608 = vunpack.c.l.b16 %v571
        %v609 = vunpack.c.l.b16 %v572
        %v610 = vunpack.c.l.b16 %v573
        %v611 = vunpack.c.l.b16 %v574
        %v612 = vunpack.c.l.b16 %v575
        %v613 = vunpack.c.l.b16 %v576
        %v614 = vunpack.c.l.b16 %v577
        %v615 = vunpack.c.l.b16 %v578
        %v616 = vunpack.c.l.b16 %v579
        %v617 = vpack.c.b16 %v602, %v601
        %v618 = vpack.c.b16 %v604, %v603
        %v619 = vpack.c.b16 %v606, %v605
        %v620 = vpack.c.b16 %v608, %v607
        %v621 = vpack.c.b16 %v610, %v609
        %v622 = vpack.c.b16 %v612, %v611
        %v623 = vpack.c.b16 %v614, %v613
        %v624 = vpack.c.b16 %v616, %v615
        %633 = vmatpush.bf16.msra.mxu0 %v624
        %634 = vmatpush.bf16.msra.mxu0 %v623
        %635 = vmatpush.bf16.msra.mxu0 %v622
        %636 = vmatpush.bf16.msra.mxu0 %v621
        %637 = vmatpush.bf16.msra.mxu0 %v620
        %638 = vmatpush.bf16.msra.mxu0 %v619
        %639 = vmatpush.bf16.msra.mxu0 %v618
        %640 = vmatpush.bf16.msra.mxu0 %v617
        %641 = vmatmul.bf16.gmra.mxu0 %v562
        %v642 = vpop.f32.mrf.mxu0
        %v643 = vadd.f32 %v583, %v642
        %v644 = vpop.f32.mrf.mxu0
        %v645 = vadd.f32 %v583, %v644
        %646 = vdwg.mxu0
        %v647 = vxor.u32 %v643, 2147483648
        %v648 = vxor.u32 %v645, 2147483648
        %v649 = vmul.f32 %v647, 1.442695
        %v650 = vpow.pop %v649
        %v651 = vmul.f32 %v648, 1.442695
        %v652 = vpow.pop %v651
        %v653 = vadd.f32 %v650, 1.0
        %v654 = vadd.f32 %v652, 1.0
        %v655 = vrcp.pop %v653
        %v656 = vmul.f32 %v653, %v655
        %v657 = vsub.f32 1.0, %v656
        %v658 = vmul.f32 %v655, %v657
        %v659 = vadd.f32 %v655, %v658
        %vm660 = vweird.f32 %v653
        %vm661 = vweird.f32 %v655
        %vm662 = vmor %vm660, %vm661
        %v663 = vsel %vm662, %v655, %v659
        %v664 = vand.u32 2147483647, %v653
        %vm665 = vcmp.eq.f32.partialorder %v664, 8.507059e+37
        %v666 = vand.u32 %v653, 2147483648
        %v667 = vor.u32 1.1754944e-38, %v666
        %v668 = vsel %vm665, %v667, %v663
        %v669 = vmul.f32 1.0, %v668
        %v670 = vrcp.pop %v654
        %v671 = vmul.f32 %v654, %v670
        %v672 = vsub.f32 1.0, %v671
        %v673 = vmul.f32 %v670, %v672
        %v674 = vadd.f32 %v670, %v673
        %vm675 = vweird.f32 %v654
        %vm676 = vweird.f32 %v670
        %vm677 = vmor %vm675, %vm676
        %v678 = vsel %vm677, %v670, %v674
        %v679 = vand.u32 2147483647, %v654
        %vm680 = vcmp.eq.f32.partialorder %v679, 8.507059e+37
        %v681 = vand.u32 %v654, 2147483648
        %v682 = vor.u32 1.1754944e-38, %v681
        %v683 = vsel %vm680, %v682, %v678
        %v684 = vmul.f32 1.0, %v683
        %v685 = vpack.c.bf16 %v684, %v669
        %s686 = scalar_lea.vmem [#allocation3], 256
        %v687 = vld [vmem:[%s686] sm:$0xf]
        %v688 = vld [vmem:[%s686 + $0x4] sm:$0xf]
        %v689 = vld [vmem:[%s686 + $0x8] sm:$0xf]
        %v690 = vld [vmem:[%s686 + $0xc] sm:$0xf]
        %v691 = vld [vmem:[%s686 + $0x10] sm:$0xf]
        %v692 = vld [vmem:[%s686 + $0x14] sm:$0xf]
        %v693 = vld [vmem:[%s686 + $0x18] sm:$0xf]
        %v694 = vld [vmem:[%s686 + $0x1c] sm:$0xf]
        %v695 = vld [vmem:[%s686 + $0x20] sm:$0xf]
        %v696 = vld [vmem:[%s686 + $0x24] sm:$0xf]
        %v697 = vld [vmem:[%s686 + $0x28] sm:$0xf]
        %v698 = vld [vmem:[%s686 + $0x2c] sm:$0xf]
        %v699 = vld [vmem:[%s686 + $0x30] sm:$0xf]
        %v700 = vld [vmem:[%s686 + $0x34] sm:$0xf]
        %v701 = vld [vmem:[%s686 + $0x38] sm:$0xf]
        %v702 = vld [vmem:[%s686 + $0x3c] sm:$0xf]
        %s703 = scalar_lea.vmem %s2, 4
        %v704 = vld [vmem:[%s703] sm:$0x1]
        %v706 = vperm.slane %v704, 0
        %v724 = vunpack.c.l.b16 %v687
        %v725 = vunpack.c.l.b16 %v688
        %v726 = vunpack.c.l.b16 %v689
        %v727 = vunpack.c.l.b16 %v690
        %v728 = vunpack.c.l.b16 %v691
        %v729 = vunpack.c.l.b16 %v692
        %v730 = vunpack.c.l.b16 %v693
        %v731 = vunpack.c.l.b16 %v694
        %v732 = vunpack.c.l.b16 %v695
        %v733 = vunpack.c.l.b16 %v696
        %v734 = vunpack.c.l.b16 %v697
        %v735 = vunpack.c.l.b16 %v698
        %v736 = vunpack.c.l.b16 %v699
        %v737 = vunpack.c.l.b16 %v700
        %v738 = vunpack.c.l.b16 %v701
        %v739 = vunpack.c.l.b16 %v702
        %v740 = vpack.c.b16 %v725, %v724
        %v741 = vpack.c.b16 %v727, %v726
        %v742 = vpack.c.b16 %v729, %v728
        %v743 = vpack.c.b16 %v731, %v730
        %v744 = vpack.c.b16 %v733, %v732
        %v745 = vpack.c.b16 %v735, %v734
        %v746 = vpack.c.b16 %v737, %v736
        %v747 = vpack.c.b16 %v739, %v738
        %756 = vmatpush.bf16.msra.mxu0 %v747
        %757 = vmatpush.bf16.msra.mxu0 %v746
        %758 = vmatpush.bf16.msra.mxu0 %v745
        %759 = vmatpush.bf16.msra.mxu0 %v744
        %760 = vmatpush.bf16.msra.mxu0 %v743
        %761 = vmatpush.bf16.msra.mxu0 %v742
        %762 = vmatpush.bf16.msra.mxu0 %v741
        %763 = vmatpush.bf16.msra.mxu0 %v740
        %764 = vmatmul.bf16.gmra.mxu0 %v685
        %v765 = vpop.f32.mrf.mxu0
        %v766 = vadd.f32 %v706, %v765
        %v767 = vpop.f32.mrf.mxu0
        %v768 = vadd.f32 %v706, %v767
        %769 = vdwg.mxu0
        %v770 = vxor.u32 %v766, 2147483648
        %v771 = vxor.u32 %v768, 2147483648
        %v772 = vmul.f32 %v770, 1.442695
        %v773 = vpow.pop %v772
        %v774 = vmul.f32 %v771, 1.442695
        %v775 = vpow.pop %v774
        %v776 = vadd.f32 %v773, 1.0
        %v777 = vadd.f32 %v775, 1.0
        %v778 = vrcp.pop %v776
        %v779 = vmul.f32 %v776, %v778
        %v780 = vsub.f32 1.0, %v779
        %v781 = vmul.f32 %v778, %v780
        %v782 = vadd.f32 %v778, %v781
        %vm783 = vweird.f32 %v776
        %vm784 = vweird.f32 %v778
        %vm785 = vmor %vm783, %vm784
        %v786 = vsel %vm785, %v778, %v782
        %v787 = vand.u32 2147483647, %v776
        %vm788 = vcmp.eq.f32.partialorder %v787, 8.507059e+37
        %v789 = vand.u32 %v776, 2147483648
        %v790 = vor.u32 1.1754944e-38, %v789
        %v791 = vsel %vm788, %v790, %v786
        %v792 = vmul.f32 1.0, %v791
        %v793 = vrcp.pop %v777
        %v794 = vmul.f32 %v777, %v793
        %v795 = vsub.f32 1.0, %v794
        %v796 = vmul.f32 %v793, %v795
        %v797 = vadd.f32 %v793, %v796
        %vm798 = vweird.f32 %v777
        %vm799 = vweird.f32 %v793
        %vm800 = vmor %vm798, %vm799
        %v801 = vsel %vm800, %v793, %v797
        %v802 = vand.u32 2147483647, %v777
        %vm803 = vcmp.eq.f32.partialorder %v802, 8.507059e+37
        %v804 = vand.u32 %v777, 2147483648
        %v805 = vor.u32 1.1754944e-38, %v804
        %v806 = vsel %vm803, %v805, %v801
        %v807 = vmul.f32 1.0, %v806
        %v808 = vpack.c.bf16 %v807, %v792
        %s809 = scalar_lea.vmem [#allocation3], 320
        %v810 = vld [vmem:[%s809] sm:$0xf]
        %v811 = vld [vmem:[%s809 + $0x4] sm:$0xf]
        %v812 = vld [vmem:[%s809 + $0x8] sm:$0xf]
        %v813 = vld [vmem:[%s809 + $0xc] sm:$0xf]
        %v814 = vld [vmem:[%s809 + $0x10] sm:$0xf]
        %v815 = vld [vmem:[%s809 + $0x14] sm:$0xf]
        %v816 = vld [vmem:[%s809 + $0x18] sm:$0xf]
        %v817 = vld [vmem:[%s809 + $0x1c] sm:$0xf]
        %v818 = vld [vmem:[%s809 + $0x20] sm:$0xf]
        %v819 = vld [vmem:[%s809 + $0x24] sm:$0xf]
        %v820 = vld [vmem:[%s809 + $0x28] sm:$0xf]
        %v821 = vld [vmem:[%s809 + $0x2c] sm:$0xf]
        %v822 = vld [vmem:[%s809 + $0x30] sm:$0xf]
        %v823 = vld [vmem:[%s809 + $0x34] sm:$0xf]
        %v824 = vld [vmem:[%s809 + $0x38] sm:$0xf]
        %v825 = vld [vmem:[%s809 + $0x3c] sm:$0xf]
        %s826 = scalar_lea.vmem %s2, 5
        %v827 = vld [vmem:[%s826] sm:$0x1]
        %v829 = vperm.slane %v827, 0
        %v847 = vunpack.c.l.b16 %v810
        %v848 = vunpack.c.l.b16 %v811
        %v849 = vunpack.c.l.b16 %v812
        %v850 = vunpack.c.l.b16 %v813
        %v851 = vunpack.c.l.b16 %v814
        %v852 = vunpack.c.l.b16 %v815
        %v853 = vunpack.c.l.b16 %v816
        %v854 = vunpack.c.l.b16 %v817
        %v855 = vunpack.c.l.b16 %v818
        %v856 = vunpack.c.l.b16 %v819
        %v857 = vunpack.c.l.b16 %v820
        %v858 = vunpack.c.l.b16 %v821
        %v859 = vunpack.c.l.b16 %v822
        %v860 = vunpack.c.l.b16 %v823
        %v861 = vunpack.c.l.b16 %v824
        %v862 = vunpack.c.l.b16 %v825
        %v863 = vpack.c.b16 %v848, %v847
        %v864 = vpack.c.b16 %v850, %v849
        %v865 = vpack.c.b16 %v852, %v851
        %v866 = vpack.c.b16 %v854, %v853
        %v867 = vpack.c.b16 %v856, %v855
        %v868 = vpack.c.b16 %v858, %v857
        %v869 = vpack.c.b16 %v860, %v859
        %v870 = vpack.c.b16 %v862, %v861
        %879 = vmatpush.bf16.msra.mxu0 %v870
        %880 = vmatpush.bf16.msra.mxu0 %v869
        %881 = vmatpush.bf16.msra.mxu0 %v868
        %882 = vmatpush.bf16.msra.mxu0 %v867
        %883 = vmatpush.bf16.msra.mxu0 %v866
        %884 = vmatpush.bf16.msra.mxu0 %v865
        %885 = vmatpush.bf16.msra.mxu0 %v864
        %886 = vmatpush.bf16.msra.mxu0 %v863
        %887 = vmatmul.bf16.gmra.mxu0 %v808
        %v888 = vpop.f32.mrf.mxu0
        %v889 = vadd.f32 %v829, %v888
        %v890 = vpop.f32.mrf.mxu0
        %v891 = vadd.f32 %v829, %v890
        %892 = vdwg.mxu0
        %893 = vxpose.xlu0.b32.start [1/16] %v889, 128
        %894 = vxpose.xlu0.b32.cont [2/16] %v891, 128
        %895 = vxpose.xlu0.b32.cont [3/16] 0.0, 128
        %896 = vxpose.xlu0.b32.cont [4/16] 0.0, 128
        %897 = vxpose.xlu0.b32.cont [5/16] 0.0, 128
        %898 = vxpose.xlu0.b32.cont [6/16] 0.0, 128
        %899 = vxpose.xlu0.b32.cont [7/16] 0.0, 128
        %900 = vxpose.xlu0.b32.cont [8/16] 0.0, 128
        %901 = vxpose.xlu0.b32.cont [9/16] 0.0, 128
        %902 = vxpose.xlu0.b32.cont [10/16] 0.0, 128
        %903 = vxpose.xlu0.b32.cont [11/16] 0.0, 128
        %904 = vxpose.xlu0.b32.cont [12/16] 0.0, 128
        %905 = vxpose.xlu0.b32.cont [13/16] 0.0, 128
        %906 = vxpose.xlu0.b32.cont [14/16] 0.0, 128
        %907 = vxpose.xlu0.b32.cont [15/16] 0.0, 128
        %908 = vxpose.xlu0.b32.end [16/16] 0.0, 128
        %v909 = vpop.trf.xlu0
        %v910 = vpop.trf.xlu0
        %v911 = vpop.trf.xlu0
        %v912 = vpop.trf.xlu0
        %v913 = vpop.trf.xlu0
        %v914 = vpop.trf.xlu0
        %v915 = vpop.trf.xlu0
        %v916 = vpop.trf.xlu0
        %v917 = vpop.trf.xlu0
        %v918 = vpop.trf.xlu0
        %v919 = vpop.trf.xlu0
        %v920 = vpop.trf.xlu0
        %v921 = vpop.trf.xlu0
        %v922 = vpop.trf.xlu0
        %v923 = vpop.trf.xlu0
        %v924 = vpop.trf.xlu0
        %vm925 = vcmask 122880
        %926 = vst.msk [vmem:[%s185] sm:$0x1] %vm925, %v909
        %p927 = scmp.lt.s32.totalorder %s15, 1
        %s928 = scalar_select %p927, %s15, 1
        %s929 = scalar_lea.vmem %s3, %s928
        // Predicated region
        $region37: #{mlp_forward.1} parent=31 // pred_check
          %p930 = pneg %p101
        $region38: #{mlp_forward.1} parent=31 // pred_check_branch
          %932 = sbr.rel (%p930) target = $region40
        $region39: #{mlp_forward.1} parent=31 // pred_region
          _
        $region40: #{mlp_forward.1} parent=31 // pred_fallthru
          _
      $region32: #{mlp_forward.1} parent=5 // pred_fallthru
        _
      %p933 = scmp.le.s32.totalorder 2, %s10
      // Predicated region
      $region41: #{mlp_forward.1} parent=5 // pred_check
        %p934 = pneg %p933
      $region42: #{mlp_forward.1} parent=5 // pred_check_branch
        %936 = sbr.rel (%p934) target = $region44
      $region43: #{mlp_forward.1} parent=5 // pred_region
        %s937 = ssub.s32 %s10, 2
        // Predicated region
        $region45: #{mlp_forward.1} parent=43 // pred_check
          %p938 = pneg %p107
        $region46: #{mlp_forward.1} parent=43 // pred_check_branch
          %940 = sbr.rel (%p938) target = $region48
        $region47: #{mlp_forward.1} parent=43 // pred_region
          %p941 = scmp.lt.s32.totalorder %s16, 1
          %s942 = scalar_select %p941, %s16, 1
          %s943 = scalar_lea.vmem %s3, %s942
        $region48: #{mlp_forward.1} parent=43 // pred_fallthru
          _
      $region44: #{mlp_forward.1} parent=5 // pred_fallthru
        _
    $region6: #{mlp_forward.1} parent=1 // loop_footer
      %s14 = sadd.s32 1, %s10
    $region7: #{mlp_forward.1} parent=1 // loop_footer_branch
      %9 = sbr.rel target = $region3
    $region8: #{mlp_forward.1} parent=1 // loop_exit
      _
    %944 = vsyncpa [#allocation4], 1
    %s945 = scalar_lea.sflag [#allocation4], 1
    %946 = vsyncpa %s945, 1

</llo_original>
